<compile_context>
chip_gen: v7x
topology: tpu7x:2x2x1
jax: 0.10.0
libtpu: 0.0.40
codegen_flags: <defaults>
</compile_context>

<pallas_src>
import jax
import jax.numpy as jnp
from jax.experimental import pallas as pl
from jax.experimental.pallas import tpu as pltpu


def _round_up(a, m):
    return (a + m - 1) // m * m


def _vmem_capacity_bytes():
    try:
        info = pltpu.get_tpu_info()
        cap = getattr(info, "vmem_capacity_bytes", None)
        if cap:
            return int(cap)
    except Exception:
        pass
    return 64 * 1024 * 1024   # conservative fallback (v7x per-TC VMEM)


def _make_ffn_kernel(K, TL, DMp, TFF, use_im2col, weights_resident):
    """Kernel factory; all flags/sizes are static (baked in at trace time)."""

    def kernel(x_ref, w1_ref, b1_ref, w2_ref, b2_ref, o_ref, *scratch):
        # x_ref : (1, 1, TL+K-1, DMp) bf16  halo window for this (b, l) tile
        # w1_ref: resident (nF, K*DMp, TFF) | streamed (K*DMp, TFF)   bf16
        # b1_ref: resident (nF, 1, TFF)     | streamed (1, TFF)        f32
        # w2_ref: resident (nF, TFF, DMp)   | streamed (TFF, DMp)      bf16
        # b2_ref: (1, DMp) f32
        # o_ref : (1, TL, DMp)
        # scratch: [col_ref (TL, K*DMp) bf16]  (im2col mode only), acc_ref (TL, DMp) f32
        if use_im2col:
            col_ref, acc_ref = scratch
        else:
            (acc_ref,) = scratch

        f = pl.program_id(2)
        n_ff = pl.num_programs(2)

        @pl.when(f == 0)
        def _():
            acc_ref[...] = jnp.zeros_like(acc_ref)
            if use_im2col:
                # Build the (TL, K*DMp) im2col patch matrix once per L-tile from K
                # static shifted views of the halo window.
                xw = x_ref[0, 0]                                   # (TL+K-1, DMp)
                cols = [xw[t:t + TL, :] for t in range(K)]
                col_ref[...] = jnp.concatenate(cols, axis=-1)

        # Per-f weight tiles: resident weights are indexed along their leading f axis
        # inside the kernel; streamed weights already arrive tiled by BlockSpec.
        if weights_resident:
            b1_t = b1_ref[f]                                        # (1, TFF)
            w2_t = w2_ref[f]                                        # (TFF, DMp)
        else:
            b1_t = b1_ref[...]
            w2_t = w2_ref[...]

        if use_im2col:
            # conv1 as ONE MXU matmul with contraction K*DMp.
            w1_t = w1_ref[f] if weights_resident else w1_ref[...]
            h = jnp.dot(col_ref[...], w1_t, preferred_element_type=jnp.float32)
        else:
            # conv1 as K accumulated per-tap matmuls (contraction DMp each); no im2col
            # scratch and no lane-axis concat when the per-tap contraction fills the MXU.
            def w1_tap(t):
                if weights_resident:
                    return w1_ref[f, t * DMp:(t + 1) * DMp, :]
                return w1_ref[t * DMp:(t + 1) * DMp, :]

            h = jnp.dot(x_ref[0, 0, 0:TL, :], w1_tap(0),
                        preferred_element_type=jnp.float32)
            for t in range(1, K):
                h = h + jnp.dot(x_ref[0, 0, t:t + TL, :], w1_tap(t),
                                preferred_element_type=jnp.float32)

        # bias + ReLU, cast to bf16, and feed conv2 directly (no staging scratch).
        h = jnp.maximum(h + b1_t, 0.0).astype(jnp.bfloat16)
        # TODO(synk): dropout is identity at inference; a training path would mask h
        # here via pltpu.prng_seed / pltpu.prng_random_bits.

        # conv2 (kernel size 1) == dense projection, accumulated over d_ff tiles.
        acc_ref[...] += jnp.dot(h, w2_t, preferred_element_type=jnp.float32)

        @pl.when(f == n_ff - 1)
        def _():
            o_ref[0] = (acc_ref[...] + b2_ref[...]).astype(o_ref.dtype)

    return kernel


def conv_relu_conv_ffn(x, w1, b1, w2, b2, first_kernel_size=9, *,
                       tile_l=1024, tile_ff=512,
                       conv1_mode="auto", weight_residency="auto"):
    """x: (B, L, d_model) f32.  w1: (K, d_model, d_ff) (PyTorch conv1.weight transposed),
    b1: (1, d_ff), w2: (d_ff, d_model) (conv2.weight squeezed+transposed), b2: (1, d_model).
    Returns (B, L, d_model)."""
    B, L, d_model = x.shape
    K = int(first_kernel_size)
    assert K % 2 == 1, "only 'same' (odd) first_kernel_size supported"
    pad = (K - 1) // 2
    d_ff = w1.shape[2]
    assert w1.shape == (K, d_model, d_ff)
    assert conv1_mode in ("auto", "im2col", "taps")
    assert weight_residency in ("auto", "resident", "stream")

    # Lane-dense channel padding; d_ff additionally padded to a multiple of 256 so the
    # d_ff matmul tile keeps the 256-wide v6e/v7x MXU full (no-op at production shapes).
    DMp = _round_up(d_model, 128)
    DFp = _round_up(d_ff, 256) if d_ff > 128 else 128

    # d_ff tile: largest MXU-friendly multiple dividing DFp, capped by tile_ff.
    step = 256 if DFp % 256 == 0 else 128
    TFF = step
    for cand in range(step, min(max(tile_ff, step), DFp) + 1, step):
        if DFp % cand == 0:
            TFF = cand
    nF = DFp // TFF

    # conv1 strategy: im2col only when the per-tap contraction would underfill the MXU.
    if conv1_mode == "auto":
        use_im2col = DMp <= 128
    else:
        use_im2col = conv1_mode == "im2col"

    vmem_cap = _vmem_capacity_bytes()

    # Whole-weight VMEM residency when the padded weight set comfortably fits
    # (counted double-buffered to be conservative).
    resident_weight_bytes = 2 * (K * DMp * DFp * 2 + DFp * DMp * 2 + DFp * 4)
    if weight_residency == "auto":
        weights_resident = resident_weight_bytes <= int(0.35 * vmem_cap)
    else:
        weights_resident = weight_residency == "resident"

    # L tile: multiple of 16 (bf16 sublane packing); shrink until the footprint fits.
    TL = max(16, min(_round_up(tile_l, 16), _round_up(L, 16)))

    def est_vmem(tl):
        e = 2 * (tl + K - 1) * DMp * 2          # x halo window (bf16, double-buffered)
        e += 2 * tl * DMp * 4                   # output tile (double-buffered)
        e += tl * DMp * 4                       # conv2 accumulator scratch
        if use_im2col:
            e += tl * K * DMp * 2               # im2col scratch
        if weights_resident:
            e += resident_weight_bytes
        else:
            e += 2 * (K * DMp * TFF * 2 + TFF * DMp * 2 + TFF * 4)
        e += 2 * DMp * 4                        # b2
        return e

    budget = int(0.8 * vmem_cap)
    while est_vmem(TL) > budget and TL > 16:
        TL = max(16, (TL // 2) // 16 * 16)
    assert TL % 16 == 0

    L_t = _round_up(L, TL)
    nL = L_t // TL
    TLH = TL + K - 1

    # ---- wrapper-side layout plumbing (plain JAX, one-time) ----
    x_p = jnp.pad(x, ((0, 0), (pad, pad + (L_t - L)), (0, DMp - d_model)))
    x_p = x_p.astype(jnp.bfloat16)                                   # (B, L_t+K-1, DMp)
    # Pre-materialize per-tile halo windows so every input block is a plain (b, l)
    # rectangle: VMEM use is L-independent and the DMA is fully pipelined by BlockSpec.
    row_idx = jnp.arange(nL)[:, None] * TL + jnp.arange(TLH)[None, :]
    x_tiles = x_p[:, row_idx, :]                                     # (B, nL, TLH, DMp)

    w1_r = jnp.pad(w1, ((0, 0), (0, DMp - d_model), (0, DFp - d_ff)))
    w1_r = w1_r.reshape(K * DMp, DFp).astype(jnp.bfloat16)           # im2col weight layout
    b1_p = jnp.pad(b1, ((0, 0), (0, DFp - d_ff))).astype(jnp.float32)
    w2_p = jnp.pad(w2, ((0, DFp - d_ff), (0, DMp - d_model))).astype(jnp.bfloat16)
    b2_p = jnp.pad(b2, ((0, 0), (0, DMp - d_model))).astype(jnp.float32)

    if weights_resident:
        # f-major 3-D layouts so the kernel can index the f-tile along the leading axis.
        w1_in = w1_r.reshape(K * DMp, nF, TFF).transpose(1, 0, 2)    # (nF, K*DMp, TFF)
        b1_in = b1_p.reshape(nF, 1, TFF)
        w2_in = w2_p.reshape(nF, TFF, DMp)
        w1_spec = pl.BlockSpec((nF, K * DMp, TFF), lambda b, l, f: (0, 0, 0))
        b1_spec = pl.BlockSpec((nF, 1, TFF), lambda b, l, f: (0, 0, 0))
        w2_spec = pl.BlockSpec((nF, TFF, DMp), lambda b, l, f: (0, 0, 0))
    else:
        w1_in, b1_in, w2_in = w1_r, b1_p, w2_p
        w1_spec = pl.BlockSpec((K * DMp, TFF), lambda b, l, f: (0, f))
        b1_spec = pl.BlockSpec((1, TFF), lambda b, l, f: (0, f))
        w2_spec = pl.BlockSpec((TFF, DMp), lambda b, l, f: (f, 0))

    scratch_shapes = []
    if use_im2col:
        scratch_shapes.append(pltpu.VMEM((TL, K * DMp), jnp.bfloat16))
    scratch_shapes.append(pltpu.VMEM((TL, DMp), jnp.float32))

    vmem_limit = min(int(0.92 * vmem_cap), est_vmem(TL) + 8 * 1024 * 1024)
    vmem_limit = max(vmem_limit, 4 * 1024 * 1024)

    kernel = _make_ffn_kernel(K, TL, DMp, TFF, use_im2col, weights_resident)

    out = pl.pallas_call(
        kernel,
        out_shape=jax.ShapeDtypeStruct((B, L_t, DMp), x.dtype),
        grid_spec=pltpu.PrefetchScalarGridSpec(
            num_scalar_prefetch=0,
            grid=(B, nL, nF),
            in_specs=[
                pl.BlockSpec((1, 1, TLH, DMp), lambda b, l, f: (b, l, 0, 0)),
                w1_spec,
                b1_spec,
                w2_spec,
                pl.BlockSpec((1, DMp), lambda b, l, f: (0, 0)),
            ],
            out_specs=pl.BlockSpec((1, TL, DMp), lambda b, l, f: (b, l, 0)),
            scratch_shapes=scratch_shapes),
        compiler_params=pltpu.CompilerParams(
            dimension_semantics=("parallel", "parallel", "arbitrary"),
            vmem_limit_bytes=vmem_limit),
    )(x_tiles, w1_in, b1_in, w2_in, b2_p)

    return out[:, :L, :d_model]


def reference(x, w1, b1, w2, b2, first_kernel_size=9):
    """Pure-JAX f32 reference with identical tap-sum semantics (matches PyTorch Conv1d)."""
    B, L, d_model = x.shape
    K = first_kernel_size
    pad = (K - 1) // 2
    x_pad = jnp.pad(x, ((0, 0), (pad, pad), (0, 0)))
    h = jnp.zeros((B, L, w1.shape[2]), jnp.float32)
    for t in range(K):
        h = h + jnp.einsum('bld,df->blf', x_pad[:, t:t + L, :], w1[t])
    h = jnp.maximum(h + b1, 0.0)
    return jnp.einsum('blf,fd->bld', h, w2) + b2


if __name__ == "__main__":
    key = jax.random.PRNGKey(0)

    def make_inputs(k, B, L, d_model, d_ff, K):
        kx, k1, k2, k3, k4 = jax.random.split(k, 5)
        x = jax.random.normal(kx, (B, L, d_model), jnp.float32)
        # PyTorch conv1.weight is (d_ff, d_model, K); stored here as (K, d_model, d_ff).
        w1 = jax.random.normal(k1, (K, d_model, d_ff), jnp.float32) * 0.05
        b1 = jax.random.normal(k2, (1, d_ff), jnp.float32) * 0.05
        # PyTorch conv2.weight is (d_model, d_ff, 1); stored here as (d_ff, d_model).
        w2 = jax.random.normal(k3, (d_ff, d_model), jnp.float32) * 0.05
        b2 = jax.random.normal(k4, (1, d_model), jnp.float32) * 0.05
        return x, w1, b1, w2, b2

    # Config A: module-ish small shape (d_model=32, d_ff=64, K=9).
    cfg_a = make_inputs(jax.random.fold_in(key, 0), 2, 16, 32, 64, 9)
    # Config B: larger channels + ragged L / d_ff -> exercises halo tiles across multiple
    # L-tiles, channel/tail padding and multi-step d_ff accumulation (per-tap conv1).
    cfg_b = make_inputs(jax.random.fold_in(key, 1), 1, 40, 256, 320, 9)

    cases = [
        (cfg_a, dict()),                                                  # auto: im2col + resident
        (cfg_a, dict(conv1_mode="taps", weight_residency="stream")),
        (cfg_b, dict(tile_l=32, tile_ff=256)),                            # auto: taps + resident
        (cfg_b, dict(tile_l=32, tile_ff=256, conv1_mode="im2col",
                     weight_residency="stream")),
    ]
    for inputs, kwargs in cases:
        x, w1, b1, w2, b2 = inputs
        out = conv_relu_conv_ffn(x, w1, b1, w2, b2, first_kernel_size=9, **kwargs)
        out = jax.block_until_ready(out)
        ref = reference(x, w1, b1, w2, b2, first_kernel_size=9)
        assert out.shape == ref.shape
        # bf16 operands with f32 accumulation vs a pure-f32 reference -> loose tolerance.
        assert jnp.allclose(out, ref, atol=5e-2, rtol=5e-2), \
            f"mismatch vs reference for kwargs={kwargs}"

    print("KERNEL_OK")
</pallas_src>

<mosaic_0001>
module attributes {stable_mosaic.version = 11 : i64} {
  func.func @kernel(%arg0: i32, %arg1: i32, %arg2: i32, %arg3: memref<1x1x24x128xbf16, #tpu.memory_space<vmem>>, %arg4: memref<1x1152x128xbf16, #tpu.memory_space<vmem>>, %arg5: memref<1x1x128xf32, #tpu.memory_space<vmem>>, %arg6: memref<1x128x128xbf16, #tpu.memory_space<vmem>>, %arg7: memref<1x128xf32, #tpu.memory_space<vmem>>, %arg8: memref<1x16x128xf32, #tpu.memory_space<vmem>>, %arg9: memref<16x1152xbf16, #tpu.memory_space<vmem>>, %arg10: memref<16x128xf32, #tpu.memory_space<vmem>>) attributes {dimension_semantics = [#tpu.dimension_semantics<parallel>, #tpu.dimension_semantics<parallel>, #tpu.dimension_semantics<arbitrary>], iteration_bounds = array<i64: 2, 1, 1>, scalar_prefetch = 0 : i64, scratch_operands = 2 : i64, tpu.core_type = #tpu.core_type<tc>, window_params = [{transform_indices = @transform_0, window_bounds = array<i64: 1, 1, 24, 128>}, {pipeline_mode = #tpu.pipeline_mode<synchronous>, transform_indices = @transform_1, window_bounds = array<i64: 1, 1152, 128>}, {pipeline_mode = #tpu.pipeline_mode<synchronous>, transform_indices = @transform_2, window_bounds = array<i64: 1, 1, 128>}, {pipeline_mode = #tpu.pipeline_mode<synchronous>, transform_indices = @transform_3, window_bounds = array<i64: 1, 128, 128>}, {pipeline_mode = #tpu.pipeline_mode<synchronous>, transform_indices = @transform_4, window_bounds = array<i64: 1, 128>}, {transform_indices = @transform_5, window_bounds = array<i64: 1, 16, 128>}]} {
    %c0_i32 = arith.constant 0 : i32
    %0 = arith.cmpi eq, %arg2, %c0_i32 : i32
    %1 = arith.extui %0 : i1 to i32
    %c0_i32_0 = arith.constant 0 : i32
    %2 = arith.cmpi ne, %1, %c0_i32_0 : i32
    scf.if %2 {
      %cst_16 = arith.constant 0.000000e+00 : f32
      %26 = vector.broadcast %cst_16 : f32 to vector<16x128xf32>
      %c0_17 = arith.constant 0 : index
      %c0_18 = arith.constant 0 : index
      %27 = vector.load %arg10[%c0_17, %c0_18] : memref<16x128xf32, #tpu.memory_space<vmem>>, vector<16x128xf32>
      tpu.vector_store %arg10[%c0_17, %c0_18], %26 {strides = array<i32>} : memref<16x128xf32, #tpu.memory_space<vmem>>, vector<16x128xf32>,
      %c0_19 = arith.constant 0 : index
      %c0_20 = arith.constant 0 : index
      %c0_21 = arith.constant 0 : index
      %c0_22 = arith.constant 0 : index
      %28 = vector.load %arg3[%c0_19, %c0_20, %c0_21, %c0_22] : memref<1x1x24x128xbf16, #tpu.memory_space<vmem>>, vector<1x1x24x128xbf16>
      %29 = vector.shape_cast %28 : vector<1x1x24x128xbf16> to vector<24x128xbf16>
      %30 = vector.extract_strided_slice %29 {offsets = [0, 0], sizes = [16, 128], strides = [1, 1]} : vector<24x128xbf16> to vector<16x128xbf16>
      %31 = vector.extract_strided_slice %29 {offsets = [1, 0], sizes = [16, 128], strides = [1, 1]} : vector<24x128xbf16> to vector<16x128xbf16>
      %32 = vector.extract_strided_slice %29 {offsets = [2, 0], sizes = [16, 128], strides = [1, 1]} : vector<24x128xbf16> to vector<16x128xbf16>
      %33 = vector.extract_strided_slice %29 {offsets = [3, 0], sizes = [16, 128], strides = [1, 1]} : vector<24x128xbf16> to vector<16x128xbf16>
      %34 = vector.extract_strided_slice %29 {offsets = [4, 0], sizes = [16, 128], strides = [1, 1]} : vector<24x128xbf16> to vector<16x128xbf16>
      %35 = vector.extract_strided_slice %29 {offsets = [5, 0], sizes = [16, 128], strides = [1, 1]} : vector<24x128xbf16> to vector<16x128xbf16>
      %36 = vector.extract_strided_slice %29 {offsets = [6, 0], sizes = [16, 128], strides = [1, 1]} : vector<24x128xbf16> to vector<16x128xbf16>
      %37 = vector.extract_strided_slice %29 {offsets = [7, 0], sizes = [16, 128], strides = [1, 1]} : vector<24x128xbf16> to vector<16x128xbf16>
      %38 = vector.extract_strided_slice %29 {offsets = [8, 0], sizes = [16, 128], strides = [1, 1]} : vector<24x128xbf16> to vector<16x128xbf16>
      %39 = tpu.concatenate %30, %31, %32, %33, %34, %35, %36, %37, %38 in 1 : vector<16x128xbf16>, vector<16x128xbf16>, vector<16x128xbf16>, vector<16x128xbf16>, vector<16x128xbf16>, vector<16x128xbf16>, vector<16x128xbf16>, vector<16x128xbf16>, vector<16x128xbf16> -> vector<16x1152xbf16>
      %c0_23 = arith.constant 0 : index
      %c0_24 = arith.constant 0 : index
      %40 = vector.load %arg9[%c0_23, %c0_24] : memref<16x1152xbf16, #tpu.memory_space<vmem>>, vector<16x1152xbf16>
      tpu.vector_store %arg9[%c0_23, %c0_24], %39 {strides = array<i32>} : memref<16x1152xbf16, #tpu.memory_space<vmem>>, vector<16x1152xbf16>,
    } else {
    }
    %3 = arith.index_cast %arg2 : i32 to index
    %c0 = arith.constant 0 : index
    %c0_1 = arith.constant 0 : index
    %4 = vector.load %arg5[%3, %c0, %c0_1] : memref<1x1x128xf32, #tpu.memory_space<vmem>>, vector<1x1x128xf32>
    %5 = vector.shape_cast %4 : vector<1x1x128xf32> to vector<1x128xf32>
    %6 = arith.index_cast %arg2 : i32 to index
    %c0_2 = arith.constant 0 : index
    %c0_3 = arith.constant 0 : index
    %7 = vector.load %arg6[%6, %c0_2, %c0_3] : memref<1x128x128xbf16, #tpu.memory_space<vmem>>, vector<1x128x128xbf16>
    %8 = vector.shape_cast %7 : vector<1x128x128xbf16> to vector<128x128xbf16>
    %9 = arith.index_cast %arg2 : i32 to index
    %c0_4 = arith.constant 0 : index
    %c0_5 = arith.constant 0 : index
    %10 = vector.load %arg4[%9, %c0_4, %c0_5] : memref<1x1152x128xbf16, #tpu.memory_space<vmem>>, vector<1x1152x128xbf16>
    %11 = vector.shape_cast %10 : vector<1x1152x128xbf16> to vector<1152x128xbf16>
    %c0_6 = arith.constant 0 : index
    %c0_7 = arith.constant 0 : index
    %12 = vector.load %arg9[%c0_6, %c0_7] : memref<16x1152xbf16, #tpu.memory_space<vmem>>, vector<16x1152xbf16>
    %cst = arith.constant dense<0.000000e+00> : vector<16x128xf32>
    %13 = tpu.matmul %12, %11, %cst {dimension_numbers = #tpu.dot_dimension_numbers<[1], [0], [0], [1], [0, 0, 1, 1], [], []>} : vector<16x1152xbf16>, vector<1152x128xbf16>, vector<16x128xf32> -> vector<16x128xf32>
    %14 = vector.broadcast %5 : vector<1x128xf32> to vector<16x128xf32>
    %15 = arith.addf %13, %14 : vector<16x128xf32>
    %cst_8 = arith.constant 0.000000e+00 : f32
    %16 = vector.broadcast %cst_8 : f32 to vector<16x128xf32>
    %17 = arith.maximumf %15, %16 : vector<16x128xf32>
    %18 = arith.truncf %17 : vector<16x128xf32> to vector<16x128xbf16>
    %c0_9 = arith.constant 0 : index
    %c0_10 = arith.constant 0 : index
    %19 = vector.load %arg10[%c0_9, %c0_10] : memref<16x128xf32, #tpu.memory_space<vmem>>, vector<16x128xf32>
    %cst_11 = arith.constant dense<0.000000e+00> : vector<16x128xf32>
    %20 = tpu.matmul %18, %8, %cst_11 {dimension_numbers = #tpu.dot_dimension_numbers<[1], [0], [0], [1], [0, 0, 1, 1], [], []>} : vector<16x128xbf16>, vector<128x128xbf16>, vector<16x128xf32> -> vector<16x128xf32>
    %21 = arith.addf %19, %20 : vector<16x128xf32>
    %c0_12 = arith.constant 0 : index
    %c0_13 = arith.constant 0 : index
    %22 = vector.load %arg10[%c0_12, %c0_13] : memref<16x128xf32, #tpu.memory_space<vmem>>, vector<16x128xf32>
    tpu.vector_store %arg10[%c0_12, %c0_13], %21 {strides = array<i32>} : memref<16x128xf32, #tpu.memory_space<vmem>>, vector<16x128xf32>,
    %c0_i32_14 = arith.constant 0 : i32
    %23 = arith.cmpi eq, %arg2, %c0_i32_14 : i32
    %24 = arith.extui %23 : i1 to i32
    %c0_i32_15 = arith.constant 0 : i32
    %25 = arith.cmpi ne, %24, %c0_i32_15 : i32
    scf.if %25 {
      %c0_16 = arith.constant 0 : index
      %c0_17 = arith.constant 0 : index
      %26 = vector.load %arg10[%c0_16, %c0_17] : memref<16x128xf32, #tpu.memory_space<vmem>>, vector<16x128xf32>
      %c0_18 = arith.constant 0 : index
      %c0_19 = arith.constant 0 : index
      %27 = vector.load %arg7[%c0_18, %c0_19] : memref<1x128xf32, #tpu.memory_space<vmem>>, vector<1x128xf32>
      %28 = vector.broadcast %27 : vector<1x128xf32> to vector<16x128xf32>
      %29 = arith.addf %26, %28 : vector<16x128xf32>
      %c0_20 = arith.constant 0 : index
      %c0_21 = arith.constant 0 : index
      %c0_22 = arith.constant 0 : index
      %30 = vector.load %arg8[%c0_20, %c0_21, %c0_22] : memref<1x16x128xf32, #tpu.memory_space<vmem>>, vector<1x16x128xf32>
      %31 = vector.shape_cast %30 : vector<1x16x128xf32> to vector<16x128xf32>
      %32 = vector.shape_cast %29 : vector<16x128xf32> to vector<1x16x128xf32>
      tpu.vector_store %arg8[%c0_20, %c0_21, %c0_22], %32 {strides = array<i32>} : memref<1x16x128xf32, #tpu.memory_space<vmem>>, vector<1x16x128xf32>,
    } else {
    }
    return
  }
  func.func @transform_0(%arg0: i32, %arg1: i32, %arg2: i32) -> (i32, i32, i32, i32) {
    %c0_i32 = arith.constant 0 : i32
    %c0_i32_0 = arith.constant 0 : i32
    %c0_i32_1 = arith.constant 0 : i32
    return %arg0, %arg1, %c0_i32, %c0_i32_0 : i32, i32, i32, i32
  }
  func.func @transform_1(%arg0: i32, %arg1: i32, %arg2: i32) -> (i32, i32, i32) {
    %c0_i32 = arith.constant 0 : i32
    %c0_i32_0 = arith.constant 0 : i32
    %c0_i32_1 = arith.constant 0 : i32
    %c0_i32_2 = arith.constant 0 : i32
    return %c0_i32, %c0_i32_0, %c0_i32_1 : i32, i32, i32
  }
  func.func @transform_2(%arg0: i32, %arg1: i32, %arg2: i32) -> (i32, i32, i32) {
    %c0_i32 = arith.constant 0 : i32
    %c0_i32_0 = arith.constant 0 : i32
    %c0_i32_1 = arith.constant 0 : i32
    %c0_i32_2 = arith.constant 0 : i32
    return %c0_i32, %c0_i32_0, %c0_i32_1 : i32, i32, i32
  }
  func.func @transform_3(%arg0: i32, %arg1: i32, %arg2: i32) -> (i32, i32, i32) {
    %c0_i32 = arith.constant 0 : i32
    %c0_i32_0 = arith.constant 0 : i32
    %c0_i32_1 = arith.constant 0 : i32
    %c0_i32_2 = arith.constant 0 : i32
    return %c0_i32, %c0_i32_0, %c0_i32_1 : i32, i32, i32
  }
  func.func @transform_4(%arg0: i32, %arg1: i32, %arg2: i32) -> (i32, i32) {
    %c0_i32 = arith.constant 0 : i32
    %c0_i32_0 = arith.constant 0 : i32
    %c0_i32_1 = arith.constant 0 : i32
    return %c0_i32, %c0_i32_0 : i32, i32
  }
  func.func @transform_5(%arg0: i32, %arg1: i32, %arg2: i32) -> (i32, i32, i32) {
    %c0_i32 = arith.constant 0 : i32
    %c0_i32_0 = arith.constant 0 : i32
    return %arg0, %arg1, %c0_i32 : i32, i32, i32
  }
}

</mosaic_0001>

<llo_original>
// kernel: tpu_custom_call.1
$region0: #{tpu_custom_call.1}
  #allocation0 [shape = 'u32[]', space=smem, size = 0x4, offset = 0x4, fixed_abs, tag = 'smem constant byte address 0x4 - core index']
  #allocation1 [shape = 'u32[144,128]{1,0:T(1,128)}', space=vmem, size = 0x12000, scoped, tag = 'internal scratch']
  #allocation2 [shape = 'bf16[16,1152]{1,0:T(16,128)(2,1)}', space=vmem, size = 0x9000, scoped, tag = 'scratch operand']
  #allocation3 [shape = 'f32[16,128]{1,0:T(8,128)}', space=vmem, size = 0x2000, scoped, tag = 'scratch operand']
  %s0 = inlined_call_operand.hbm [shape: bf16[2,1,24,128], index: 0, kind: input, shape index: {}]
  %s1 = inlined_call_operand.hbm [shape: bf16[1,1152,128], index: 1, kind: input, shape index: {}]
  %s2 = inlined_call_operand.vmem [shape: f32[1,1,128], index: 2, kind: input, shape index: {}]
  %s3 = inlined_call_operand.hbm [shape: bf16[1,128,128], index: 3, kind: input, shape index: {}]
  %s4 = inlined_call_operand.vmem [shape: f32[1,128], index: 4, kind: input, shape index: {}]
  %s5 = inlined_call_operand.hbm [shape: f32[2,16,128], index: 5, kind: output, shape index: {}]
  %s6 = sld [smem:[#allocation0]]
  $region73: #{tpu_custom_call.1} parent=0
    _
  %s8 = ssub.s32 1, %s6
  %s9 = scalar_select 0, %s8, %s6
  $region1: #{tpu_custom_call.1} parent=0
    #allocation4 [shape = 'u8[12288]{0}', space=vmem, size = 0x3000, scoped, tag = 'input window, operand 0']
    #allocation5 [shape = 's32[2]{0}', space=sflag, size = 0x8, scoped, tag = 'scoped memory for tpu_custom_call.1']
    #allocation6 [shape = 's32[2]{0}', space=sflag, size = 0x8, scoped, tag = 'scoped memory for tpu_custom_call.1']
    #allocation7 [shape = 'u8[294912]{0}', space=vmem, size = 0x48000, scoped, tag = 'input window, operand 1, single buffered']
    #allocation8 [shape = 's32[1]{0}', space=sflag, size = 0x4, scoped, tag = 'scoped memory for tpu_custom_call.1']
    #allocation9 [shape = 'u8[32768]{0}', space=vmem, size = 0x8000, scoped, tag = 'input window, operand 3, single buffered']
    #allocation10 [shape = 'u8[16384]{0}', space=vmem, size = 0x4000, scoped, tag = 'output window, operand 0']
    %10 = vsyncpa [#allocation5], 0
    %s11 = scalar_lea.sflag [#allocation5], 1
    %12 = vsyncpa %s11, 0
    %13 = vsyncpa [#allocation8], 0
    %14 = vsyncpa [#allocation6], 0
    %s15 = scalar_lea.sflag [#allocation6], 1
    %16 = vsyncpa %s15, 0
    loop: start=0, step=1, limit=4
    $region2: #{tpu_custom_call.1} parent=1 // loop_pre_header
      _
    $region3: #{tpu_custom_call.1} parent=1 // loop_header
      %s18 = sphi 0, %s22
      %p19 = scmp.ge.s32.totalorder %s18, 4
      %s25 = sphi 0, %s44
      %s26 = sphi 0, %s40
      %s27 = sphi 0, %s36
      %s28 = sphi 0, %s25
      %s29 = sphi 0, %s26
      %s30 = sphi 0, %s27
      %s31 = sphi 0, %s28
      %s32 = sphi 0, %s29
      %s33 = sphi 0, %s30
      %s49 = sphi 0, %s51
      %s52 = sphi 0, %s49
      %s53 = sphi 0, %s52
      %s69 = sphi 0, %s53
      %s73 = sphi 0, %s73
      %s75 = sphi 0, %s73
      %s76 = sphi 0, %s75
      %s90 = sphi 0, %s76
      %s94 = sphi 0, %s94
      %s96 = sphi 0, %s94
      %s97 = sphi 0, %s96
      %s111 = sphi 0, %s97
      %s115 = sphi 0, %s115
      %s117 = sphi 0, %s115
      %s118 = sphi 0, %s117
      %s132 = sphi 0, %s118
      %s136 = sphi 0, %s136
      %s138 = sphi 0, %s136
      %s139 = sphi 0, %s138
      %s153 = sphi 0, %s139
      %s161 = sphi 0, %s163
      %s164 = sphi 0, %s161
      %s165 = sphi 0, %s164
      %s181 = sphi 0, %s165
    $region4: #{tpu_custom_call.1} parent=1 // loop_header_branch
      %21 = sbr.rel (%p19) target = $region8
    $region5: #{tpu_custom_call.1} parent=1 // loop_body
      %s23 = ssub.s32 %s18, 1
      %s24 = ssub.s32 %s18, 2
      %s34 = sadd.s32 1, %s27
      %p35 = scmp.ge.s32.totalorder %s34, 1
      %s36 = scalar_select %p35, 0, %s34
      %s37 = sadd.s32 1, %s26
      %s38 = scalar_select %p35, %s37, %s26
      %p39 = scmp.ge.s32.totalorder %s38, 1
      %s40 = scalar_select %p39, 0, %s38
      %s41 = sadd.s32 1, %s25
      %s42 = scalar_select %p39, %s41, %s25
      %p43 = scmp.ge.s32.totalorder %s42, 2
      %s44 = scalar_select %p43, 0, %s42
      %s45 = ssub.s32 %s25, %s44
      %s46 = ssub.s32 %s26, %s40
      %s47 = sor.u32 %s45, %s46
      %p48 = scmp.eq.s32.totalorder %s47, 0
      %s50 = sadd.s32 %s49, 1
      %s51 = scalar_select %p48, %s49, %s50
      %p54 = pneg %p48
      %p55 = scmp.eq.s32.totalorder %s18, 1
      %p56 = por %p54, %p55
      %p57 = scmp.ne.s32.totalorder %s49, %s52
      %p58 = scmp.eq.s32.totalorder %s18, 0
      %p59 = por %p57, %p58
      %p60 = scmp.ne.s32.totalorder %s49, %s52
      %p61 = scmp.eq.s32.totalorder %s23, 1
      %p62 = por %p60, %p61
      %p63 = scmp.ne.s32.totalorder %s52, %s53
      %p64 = scmp.eq.s32.totalorder %s23, 0
      %p65 = por %p63, %p64
      %p66 = scmp.ne.s32.totalorder %s52, %s53
      %p67 = scmp.eq.s32.totalorder %s24, 1
      %p68 = por %p66, %p67
      %p70 = scmp.ne.s32.totalorder %s53, %s69
      %p71 = scmp.eq.s32.totalorder %s24, 0
      %p72 = por %p70, %p71
      %s74 = sadd.s32 %s73, 1
      %p77 = scmp.eq.s32.totalorder %s18, 1
      %p78 = scmp.ne.s32.totalorder %s73, %s75
      %p79 = scmp.eq.s32.totalorder %s18, 0
      %p80 = por %p78, %p79
      %p81 = scmp.ne.s32.totalorder %s73, %s75
      %p82 = scmp.eq.s32.totalorder %s23, 1
      %p83 = por %p81, %p82
      %p84 = scmp.ne.s32.totalorder %s75, %s76
      %p85 = scmp.eq.s32.totalorder %s23, 0
      %p86 = por %p84, %p85
      %p87 = scmp.ne.s32.totalorder %s75, %s76
      %p88 = scmp.eq.s32.totalorder %s24, 1
      %p89 = por %p87, %p88
      %p91 = scmp.ne.s32.totalorder %s76, %s90
      %p92 = scmp.eq.s32.totalorder %s24, 0
      %p93 = por %p91, %p92
      %s95 = sadd.s32 %s94, 1
      %p98 = scmp.eq.s32.totalorder %s18, 1
      %p99 = scmp.ne.s32.totalorder %s94, %s96
      %p100 = scmp.eq.s32.totalorder %s18, 0
      %p101 = por %p99, %p100
      %p102 = scmp.ne.s32.totalorder %s94, %s96
      %p103 = scmp.eq.s32.totalorder %s23, 1
      %p104 = por %p102, %p103
      %p105 = scmp.ne.s32.totalorder %s96, %s97
      %p106 = scmp.eq.s32.totalorder %s23, 0
      %p107 = por %p105, %p106
      %p108 = scmp.ne.s32.totalorder %s96, %s97
      %p109 = scmp.eq.s32.totalorder %s24, 1
      %p110 = por %p108, %p109
      %p112 = scmp.ne.s32.totalorder %s97, %s111
      %p113 = scmp.eq.s32.totalorder %s24, 0
      %p114 = por %p112, %p113
      %s116 = sadd.s32 %s115, 1
      %p119 = scmp.eq.s32.totalorder %s18, 1
      %p120 = scmp.ne.s32.totalorder %s115, %s117
      %p121 = scmp.eq.s32.totalorder %s18, 0
      %p122 = por %p120, %p121
      %p123 = scmp.ne.s32.totalorder %s115, %s117
      %p124 = scmp.eq.s32.totalorder %s23, 1
      %p125 = por %p123, %p124
      %p126 = scmp.ne.s32.totalorder %s117, %s118
      %p127 = scmp.eq.s32.totalorder %s23, 0
      %p128 = por %p126, %p127
      %p129 = scmp.ne.s32.totalorder %s117, %s118
      %p130 = scmp.eq.s32.totalorder %s24, 1
      %p131 = por %p129, %p130
      %p133 = scmp.ne.s32.totalorder %s118, %s132
      %p134 = scmp.eq.s32.totalorder %s24, 0
      %p135 = por %p133, %p134
      %s137 = sadd.s32 %s136, 1
      %p140 = scmp.eq.s32.totalorder %s18, 1
      %p141 = scmp.ne.s32.totalorder %s136, %s138
      %p142 = scmp.eq.s32.totalorder %s18, 0
      %p143 = por %p141, %p142
      %p144 = scmp.ne.s32.totalorder %s136, %s138
      %p145 = scmp.eq.s32.totalorder %s23, 1
      %p146 = por %p144, %p145
      %p147 = scmp.ne.s32.totalorder %s138, %s139
      %p148 = scmp.eq.s32.totalorder %s23, 0
      %p149 = por %p147, %p148
      %p150 = scmp.ne.s32.totalorder %s138, %s139
      %p151 = scmp.eq.s32.totalorder %s24, 1
      %p152 = por %p150, %p151
      %p154 = scmp.ne.s32.totalorder %s139, %s153
      %p155 = scmp.eq.s32.totalorder %s24, 0
      %p156 = por %p154, %p155
      %s157 = ssub.s32 %s25, %s44
      %s158 = ssub.s32 %s26, %s40
      %s159 = sor.u32 %s157, %s158
      %p160 = scmp.eq.s32.totalorder %s159, 0
      %s162 = sadd.s32 %s161, 1
      %s163 = scalar_select %p160, %s161, %s162
      %p166 = pneg %p160
      %p167 = scmp.eq.s32.totalorder %s18, 1
      %p168 = por %p166, %p167
      %p169 = scmp.ne.s32.totalorder %s161, %s164
      %p170 = scmp.eq.s32.totalorder %s18, 0
      %p171 = por %p169, %p170
      %p172 = scmp.ne.s32.totalorder %s161, %s164
      %p173 = scmp.eq.s32.totalorder %s23, 1
      %p174 = por %p172, %p173
      %p175 = scmp.ne.s32.totalorder %s164, %s165
      %p176 = scmp.eq.s32.totalorder %s23, 0
      %p177 = por %p175, %p176
      %p178 = scmp.ne.s32.totalorder %s164, %s165
      %p179 = scmp.eq.s32.totalorder %s24, 1
      %p180 = por %p178, %p179
      %p182 = scmp.ne.s32.totalorder %s165, %s181
      %p183 = scmp.eq.s32.totalorder %s24, 0
      %p184 = por %p182, %p183
      %p185 = scmp.le.s32.totalorder 1, %s18
      %p186 = scmp.lt.s32.totalorder %s18, 3
      %p187 = pnand %p185, %p186
      %p188 = pneg %p187
      // Predicated region
      $region9: #{tpu_custom_call.1} parent=5 // pred_check
        _
      $region10: #{tpu_custom_call.1} parent=5 // pred_check_branch
        %190 = sbr.rel (%p187) target = $region12
      $region11: #{tpu_custom_call.1} parent=5 // pred_region
        %s191 = ssub.s32 %s18, 1
        // Predicated region
        $region13: #{tpu_custom_call.1} parent=11 // pred_check
          %p192 = pneg %p86
        $region14: #{tpu_custom_call.1} parent=11 // pred_check_branch
          %194 = sbr.rel (%p192) target = $region16
        $region15: #{tpu_custom_call.1} parent=11 // pred_region
          %s196 = ssub.s32 9216, 9216
          %197 = vsyncadd [#allocation8], %s196
          %s198 = sshll.u32 [#allocation7], 4
          %s199 = int_to_ptr.vmem [resolvable:$true] %s198
          %204 = dma.hbm_to_vmem [thread:$0]  %s1, 9216, %s199, [#allocation8], 64, 64, 4
        $region16: #{tpu_custom_call.1} parent=11 // pred_fallthru
          _
        // Predicated region
        $region17: #{tpu_custom_call.1} parent=11 // pred_check
          %p205 = pneg %p107
        $region18: #{tpu_custom_call.1} parent=11 // pred_check_branch
          %207 = sbr.rel (%p205) target = $region20
        $region19: #{tpu_custom_call.1} parent=11 // pred_region
          _
        $region20: #{tpu_custom_call.1} parent=11 // pred_fallthru
          _
        // Predicated region
        $region21: #{tpu_custom_call.1} parent=11 // pred_check
          %p208 = pneg %p128
        $region22: #{tpu_custom_call.1} parent=11 // pred_check_branch
          %210 = sbr.rel (%p208) target = $region24
        $region23: #{tpu_custom_call.1} parent=11 // pred_region
          %s212 = ssub.s32 1024, 1024
          %213 = vsyncadd [#allocation8], %s212
          %s214 = sshll.u32 [#allocation9], 4
          %s215 = int_to_ptr.vmem [resolvable:$true] %s214
          %220 = dma.hbm_to_vmem [thread:$0]  %s3, 1024, %s215, [#allocation8], 64, 64, 4
        $region24: #{tpu_custom_call.1} parent=11 // pred_fallthru
          _
        // Predicated region
        $region25: #{tpu_custom_call.1} parent=11 // pred_check
          %p221 = pneg %p149
        $region26: #{tpu_custom_call.1} parent=11 // pred_check_branch
          %223 = sbr.rel (%p221) target = $region28
        $region27: #{tpu_custom_call.1} parent=11 // pred_region
          _
        $region28: #{tpu_custom_call.1} parent=11 // pred_fallthru
          _
      $region12: #{tpu_custom_call.1} parent=5 // pred_fallthru
        _
      %p224 = scmp.lt.s32.totalorder %s18, 2
      // Predicated region
      $region29: #{tpu_custom_call.1} parent=5 // pred_check
        %p225 = pneg %p224
      $region30: #{tpu_custom_call.1} parent=5 // pred_check_branch
        %227 = sbr.rel (%p225) target = $region32
      $region31: #{tpu_custom_call.1} parent=5 // pred_region
        // Predicated region
        $region33: #{tpu_custom_call.1} parent=31 // pred_check
          %p228 = pneg %p59
        $region34: #{tpu_custom_call.1} parent=31 // pred_check_branch
          %230 = sbr.rel (%p228) target = $region36
        $region35: #{tpu_custom_call.1} parent=31 // pred_region
          %s231 = sand.u32 %s49, 1
          %s232 = scalar_lea.sflag [#allocation5], %s231
          %s233 = sand.u32 %s49, 1
          %s234 = smul.addr %s233, 12
          %s235 = scalar_lea.vmem [#allocation4], %s234
          %s237 = ssub.s32 192, 192
          %238 = vsyncadd %s232, %s237
          %s239 = smul.addr %s26, 3
          %s240 = smul.addr %s25, 3
          %s241 = sadd.s32 %s239, %s240
          %s242 = smul.addr %s241, 64
          %s243 = scalar_lea.hbm %s0, %s242
          %s244 = sshll.u32 %s235, 4
          %s245 = int_to_ptr.vmem [resolvable:$true] %s244
          %250 = dma.hbm_to_vmem [thread:$0]  %s243, 192, %s245, %s232, 64, 64, 4
        $region36: #{tpu_custom_call.1} parent=31 // pred_fallthru
          _
      $region32: #{tpu_custom_call.1} parent=5 // pred_fallthru
        _
      %p251 = scmp.le.s32.totalorder 1, %s18
      %p252 = scmp.lt.s32.totalorder %s18, 3
      %p253 = pnand %p251, %p252
      %p254 = pneg %p253
      // Predicated region
      $region37: #{tpu_custom_call.1} parent=5 // pred_check
        _
      $region38: #{tpu_custom_call.1} parent=5 // pred_check_branch
        %256 = sbr.rel (%p253) target = $region40
      $region39: #{tpu_custom_call.1} parent=5 // pred_region
        %s257 = ssub.s32 %s18, 1
        %s258 = sand.u32 %s52, 1
        %s259 = scalar_lea.sflag [#allocation5], %s258
        %s260 = sand.u32 %s52, 1
        %s261 = smul.addr %s260, 12
        %s262 = scalar_lea.vmem [#allocation4], %s261
        // Predicated region
        $region41: #{tpu_custom_call.1} parent=39 // pred_check
          %p263 = pneg %p65
        $region42: #{tpu_custom_call.1} parent=39 // pred_check_branch
          %265 = sbr.rel (%p263) target = $region44
        $region43: #{tpu_custom_call.1} parent=39 // pred_region
          %266 = dma.done %s259, 192
        $region44: #{tpu_custom_call.1} parent=39 // pred_fallthru
          _
        // Predicated region
        $region45: #{tpu_custom_call.1} parent=39 // pred_check
          %p267 = pneg %p86
        $region46: #{tpu_custom_call.1} parent=39 // pred_check_branch
          %269 = sbr.rel (%p267) target = $region48
        $region47: #{tpu_custom_call.1} parent=39 // pred_region
          %270 = dma.done [#allocation8], 9216
        $region48: #{tpu_custom_call.1} parent=39 // pred_fallthru
          _
        // Predicated region
        $region49: #{tpu_custom_call.1} parent=39 // pred_check
          %p271 = pneg %p128
        $region50: #{tpu_custom_call.1} parent=39 // pred_check_branch
          %273 = sbr.rel (%p271) target = $region52
        $region51: #{tpu_custom_call.1} parent=39 // pred_region
          %274 = dma.done [#allocation8], 1024
        $region52: #{tpu_custom_call.1} parent=39 // pred_fallthru
          _
        %s275 = sand.u32 %s52, 1
        %s276 = scalar_lea.sflag [#allocation5], %s275
        %s277 = sand.u32 %s52, 1
        %s278 = smul.addr %s277, 12
        %s279 = scalar_lea.vmem [#allocation4], %s278
        %p280 = pneg %p65
        %p281 = pneg %p62
        %p282 = pneg %p86
        %p283 = pneg %p83
        %p284 = pneg %p107
        %p285 = pneg %p104
        %p286 = pneg %p128
        %p287 = pneg %p125
        %p288 = pneg %p149
        %p289 = pneg %p146
        %p290 = pneg %p177
        %p291 = pneg %p174
        %s292 = sand.u32 %s164, 1
        %s293 = scalar_lea.sflag [#allocation6], %s292
        %s294 = sand.u32 %s164, 1
        %s295 = smul.addr %s294, 16
        %s296 = scalar_lea.vmem [#allocation10], %s295
        %s297 = smul.u32 2, %s29
        %p299 = scmp.eq.s32.totalorder %s30, 0
        // Predicated region
        $region53: #{tpu_custom_call.1} parent=39 // pred_check
          %p300 = pneg %p299
        $region54: #{tpu_custom_call.1} parent=39 // pred_check_branch
          %302 = sbr.rel (%p300) target = $region56
        $region55: #{tpu_custom_call.1} parent=39 // pred_region
          %303 = vst [vmem:[#allocation3] sm:$0xff] 0.0
          %304 = vst [vmem:[#allocation3 + $0x8] sm:$0xff] 0.0
          %v305 = vld [vmem:[%s262] sm:$0xf]
          %v306 = vld [vmem:[%s262 + $0x4] sm:$0xf]
          %v307 = vld [vmem:[%s262 + $0x8] sm:$0xf]
          %v310 = vunpack.c.l.b16 %v305
          %v311 = vunpack.c.l.b16 %v306
          %v312 = vpack.c.b16 %v311, %v310
          %v315 = vunpack.c.l.b16 %v307
          %v316 = vpack.c.b16 %v315, %v315
          %vm317 = vsmask.f32 7424
          %v319 = vshrl.u32 %v312, 16
          %v321 = vshll.u32 %v312, 16
          %v323 = vrot.slane %v321, 1
          %v324 = vor.u32 %v319, %v323
          %v326 = vshll.u32 %v316, 16
          %v328 = vrot.slane %v326, 1
          %v329 = vsel %vm317, %v324, %v328
          %vm331 = vcmask 1046528
          %v332 = vrot.slane %v312, 1
          %v333 = vrot.slane %v316, 1
          %v334 = vsel %vm331, %v332, %v333
          %vm336 = vsmask.f32 6400
          %v337 = vrot.slane %v319, 1
          %v338 = vrot.slane %v321, 2
          %v339 = vor.u32 %v337, %v338
          %v340 = vshrl.u32 %v316, 16
          %v342 = vrot.slane %v340, 1
          %v343 = vrot.slane %v326, 2
          %v344 = vor.u32 %v342, %v343
          %v345 = vsel %vm336, %v339, %v344
          %vm347 = vcmask 1045504
          %v348 = vrot.slane %v312, 2
          %v349 = vrot.slane %v316, 2
          %v350 = vsel %vm347, %v348, %v349
          %vm352 = vsmask.f32 5376
          %v353 = vrot.slane %v319, 2
          %v354 = vrot.slane %v321, 3
          %v355 = vor.u32 %v353, %v354
          %v356 = vrot.slane %v340, 2
          %v357 = vrot.slane %v326, 3
          %v358 = vor.u32 %v356, %v357
          %v359 = vsel %vm352, %v355, %v358
          %vm361 = vcmask 1044480
          %v362 = vrot.slane %v312, 3
          %v363 = vrot.slane %v316, 3
          %v364 = vsel %vm361, %v362, %v363
          %vm366 = vsmask.f32 4352
          %v367 = vrot.slane %v319, 3
          %v368 = vrot.slane %v321, 4
          %v369 = vor.u32 %v367, %v368
          %v370 = vrot.slane %v340, 3
          %v371 = vrot.slane %v326, 4
          %v372 = vor.u32 %v370, %v371
          %v373 = vsel %vm366, %v369, %v372
          %v375 = vpack.c.b16 %v315, %v311
          %377 = vst [vmem:[#allocation2] sm:$0xff] %v312
          %378 = vst [vmem:[#allocation2 + $0x8] sm:$0xff] %v329
          %379 = vst [vmem:[#allocation2 + $0x10] sm:$0xff] %v334
          %380 = vst [vmem:[#allocation2 + $0x18] sm:$0xff] %v345
          %381 = vst [vmem:[#allocation2 + $0x20] sm:$0xff] %v350
          %382 = vst [vmem:[#allocation2 + $0x28] sm:$0xff] %v359
          %383 = vst [vmem:[#allocation2 + $0x30] sm:$0xff] %v364
          %384 = vst [vmem:[#allocation2 + $0x38] sm:$0xff] %v373
          %385 = vst [vmem:[#allocation2 + $0x40] sm:$0xff] %v375
        $region56: #{tpu_custom_call.1} parent=39 // pred_fallthru
          _
        %s386 = scalar_lea.vmem %s2, %s30
        %v387 = vld [vmem:[%s386] sm:$0x1]
        %s388 = smul.u32 %s30, 16
        %s389 = smul.addr %s388, 4
        %s390 = scalar_lea.vmem [#allocation9], %s389
        %v391 = vld [vmem:[%s390] sm:$0xf]
        %v392 = vld [vmem:[%s390 + $0x4] sm:$0xf]
        %v393 = vld [vmem:[%s390 + $0x8] sm:$0xf]
        %v394 = vld [vmem:[%s390 + $0xc] sm:$0xf]
        %v395 = vld [vmem:[%s390 + $0x10] sm:$0xf]
        %v396 = vld [vmem:[%s390 + $0x14] sm:$0xf]
        %v397 = vld [vmem:[%s390 + $0x18] sm:$0xf]
        %v398 = vld [vmem:[%s390 + $0x1c] sm:$0xf]
        %v399 = vld [vmem:[%s390 + $0x20] sm:$0xf]
        %v400 = vld [vmem:[%s390 + $0x24] sm:$0xf]
        %v401 = vld [vmem:[%s390 + $0x28] sm:$0xf]
        %v402 = vld [vmem:[%s390 + $0x2c] sm:$0xf]
        %v403 = vld [vmem:[%s390 + $0x30] sm:$0xf]
        %v404 = vld [vmem:[%s390 + $0x34] sm:$0xf]
        %v405 = vld [vmem:[%s390 + $0x38] sm:$0xf]
        %v406 = vld [vmem:[%s390 + $0x3c] sm:$0xf]
        %s407 = smul.u32 %s30, 144
        %s408 = smul.addr %s407, 4
        %s409 = scalar_lea.vmem [#allocation7], %s408
        %v410 = vld [vmem:[%s409] sm:$0xf]
        %v411 = vld [vmem:[%s409 + $0x4] sm:$0xf]
        %v412 = vld [vmem:[%s409 + $0x8] sm:$0xf]
        %v413 = vld [vmem:[%s409 + $0xc] sm:$0xf]
        %v414 = vld [vmem:[%s409 + $0x10] sm:$0xf]
        %v415 = vld [vmem:[%s409 + $0x14] sm:$0xf]
        %v416 = vld [vmem:[%s409 + $0x18] sm:$0xf]
        %v417 = vld [vmem:[%s409 + $0x1c] sm:$0xf]
        %v418 = vld [vmem:[%s409 + $0x20] sm:$0xf]
        %v419 = vld [vmem:[%s409 + $0x24] sm:$0xf]
        %v420 = vld [vmem:[%s409 + $0x28] sm:$0xf]
        %v421 = vld [vmem:[%s409 + $0x2c] sm:$0xf]
        %v422 = vld [vmem:[%s409 + $0x30] sm:$0xf]
        %v423 = vld [vmem:[%s409 + $0x34] sm:$0xf]
        %v424 = vld [vmem:[%s409 + $0x38] sm:$0xf]
        %v425 = vld [vmem:[%s409 + $0x3c] sm:$0xf]
        %v426 = vld [vmem:[%s409 + $0x40] sm:$0xf]
        %v427 = vld [vmem:[%s409 + $0x44] sm:$0xf]
        %v428 = vld [vmem:[%s409 + $0x48] sm:$0xf]
        %v429 = vld [vmem:[%s409 + $0x4c] sm:$0xf]
        %v430 = vld [vmem:[%s409 + $0x50] sm:$0xf]
        %v431 = vld [vmem:[%s409 + $0x54] sm:$0xf]
        %v432 = vld [vmem:[%s409 + $0x58] sm:$0xf]
        %v433 = vld [vmem:[%s409 + $0x5c] sm:$0xf]
        %v434 = vld [vmem:[%s409 + $0x60] sm:$0xf]
        %v435 = vld [vmem:[%s409 + $0x64] sm:$0xf]
        %v436 = vld [vmem:[%s409 + $0x68] sm:$0xf]
        %v437 = vld [vmem:[%s409 + $0x6c] sm:$0xf]
        %v438 = vld [vmem:[%s409 + $0x70] sm:$0xf]
        %v439 = vld [vmem:[%s409 + $0x74] sm:$0xf]
        %v440 = vld [vmem:[%s409 + $0x78] sm:$0xf]
        %v441 = vld [vmem:[%s409 + $0x7c] sm:$0xf]
        %v442 = vld [vmem:[%s409 + $0x80] sm:$0xf]
        %v443 = vld [vmem:[%s409 + $0x84] sm:$0xf]
        %v444 = vld [vmem:[%s409 + $0x88] sm:$0xf]
        %v445 = vld [vmem:[%s409 + $0x8c] sm:$0xf]
        %v446 = vld [vmem:[%s409 + $0x90] sm:$0xf]
        %v447 = vld [vmem:[%s409 + $0x94] sm:$0xf]
        %v448 = vld [vmem:[%s409 + $0x98] sm:$0xf]
        %v449 = vld [vmem:[%s409 + $0x9c] sm:$0xf]
        %v450 = vld [vmem:[%s409 + $0xa0] sm:$0xf]
        %v451 = vld [vmem:[%s409 + $0xa4] sm:$0xf]
        %v452 = vld [vmem:[%s409 + $0xa8] sm:$0xf]
        %v453 = vld [vmem:[%s409 + $0xac] sm:$0xf]
        %v454 = vld [vmem:[%s409 + $0xb0] sm:$0xf]
        %v455 = vld [vmem:[%s409 + $0xb4] sm:$0xf]
        %v456 = vld [vmem:[%s409 + $0xb8] sm:$0xf]
        %v457 = vld [vmem:[%s409 + $0xbc] sm:$0xf]
        %v458 = vld [vmem:[%s409 + $0xc0] sm:$0xf]
        %v459 = vld [vmem:[%s409 + $0xc4] sm:$0xf]
        %v460 = vld [vmem:[%s409 + $0xc8] sm:$0xf]
        %v461 = vld [vmem:[%s409 + $0xcc] sm:$0xf]
        %v462 = vld [vmem:[%s409 + $0xd0] sm:$0xf]
        %v463 = vld [vmem:[%s409 + $0xd4] sm:$0xf]
        %v464 = vld [vmem:[%s409 + $0xd8] sm:$0xf]
        %v465 = vld [vmem:[%s409 + $0xdc] sm:$0xf]
        %v466 = vld [vmem:[%s409 + $0xe0] sm:$0xf]
        %v467 = vld [vmem:[%s409 + $0xe4] sm:$0xf]
        %v468 = vld [vmem:[%s409 + $0xe8] sm:$0xf]
        %v469 = vld [vmem:[%s409 + $0xec] sm:$0xf]
        %v470 = vld [vmem:[%s409 + $0xf0] sm:$0xf]
        %v471 = vld [vmem:[%s409 + $0xf4] sm:$0xf]
        %v472 = vld [vmem:[%s409 + $0xf8] sm:$0xf]
        %v473 = vld [vmem:[%s409 + $0xfc] sm:$0xf]
        %v474 = vld [vmem:[%s409 + $0x100] sm:$0xf]
        %v475 = vld [vmem:[%s409 + $0x104] sm:$0xf]
        %v476 = vld [vmem:[%s409 + $0x108] sm:$0xf]
        %v477 = vld [vmem:[%s409 + $0x10c] sm:$0xf]
        %v478 = vld [vmem:[%s409 + $0x110] sm:$0xf]
        %v479 = vld [vmem:[%s409 + $0x114] sm:$0xf]
        %v480 = vld [vmem:[%s409 + $0x118] sm:$0xf]
        %v481 = vld [vmem:[%s409 + $0x11c] sm:$0xf]
        %v482 = vld [vmem:[%s409 + $0x120] sm:$0xf]
        %v483 = vld [vmem:[%s409 + $0x124] sm:$0xf]
        %v484 = vld [vmem:[%s409 + $0x128] sm:$0xf]
        %v485 = vld [vmem:[%s409 + $0x12c] sm:$0xf]
        %v486 = vld [vmem:[%s409 + $0x130] sm:$0xf]
        %v487 = vld [vmem:[%s409 + $0x134] sm:$0xf]
        %v488 = vld [vmem:[%s409 + $0x138] sm:$0xf]
        %v489 = vld [vmem:[%s409 + $0x13c] sm:$0xf]
        %v490 = vld [vmem:[%s409 + $0x140] sm:$0xf]
        %v491 = vld [vmem:[%s409 + $0x144] sm:$0xf]
        %v492 = vld [vmem:[%s409 + $0x148] sm:$0xf]
        %v493 = vld [vmem:[%s409 + $0x14c] sm:$0xf]
        %v494 = vld [vmem:[%s409 + $0x150] sm:$0xf]
        %v495 = vld [vmem:[%s409 + $0x154] sm:$0xf]
        %v496 = vld [vmem:[%s409 + $0x158] sm:$0xf]
        %v497 = vld [vmem:[%s409 + $0x15c] sm:$0xf]
        %v498 = vld [vmem:[%s409 + $0x160] sm:$0xf]
        %v499 = vld [vmem:[%s409 + $0x164] sm:$0xf]
        %v500 = vld [vmem:[%s409 + $0x168] sm:$0xf]
        %v501 = vld [vmem:[%s409 + $0x16c] sm:$0xf]
        %v502 = vld [vmem:[%s409 + $0x170] sm:$0xf]
        %v503 = vld [vmem:[%s409 + $0x174] sm:$0xf]
        %v504 = vld [vmem:[%s409 + $0x178] sm:$0xf]
        %v505 = vld [vmem:[%s409 + $0x17c] sm:$0xf]
        %v506 = vld [vmem:[%s409 + $0x180] sm:$0xf]
        %v507 = vld [vmem:[%s409 + $0x184] sm:$0xf]
        %v508 = vld [vmem:[%s409 + $0x188] sm:$0xf]
        %v509 = vld [vmem:[%s409 + $0x18c] sm:$0xf]
        %v510 = vld [vmem:[%s409 + $0x190] sm:$0xf]
        %v511 = vld [vmem:[%s409 + $0x194] sm:$0xf]
        %v512 = vld [vmem:[%s409 + $0x198] sm:$0xf]
        %v513 = vld [vmem:[%s409 + $0x19c] sm:$0xf]
        %v514 = vld [vmem:[%s409 + $0x1a0] sm:$0xf]
        %v515 = vld [vmem:[%s409 + $0x1a4] sm:$0xf]
        %v516 = vld [vmem:[%s409 + $0x1a8] sm:$0xf]
        %v517 = vld [vmem:[%s409 + $0x1ac] sm:$0xf]
        %v518 = vld [vmem:[%s409 + $0x1b0] sm:$0xf]
        %v519 = vld [vmem:[%s409 + $0x1b4] sm:$0xf]
        %v520 = vld [vmem:[%s409 + $0x1b8] sm:$0xf]
        %v521 = vld [vmem:[%s409 + $0x1bc] sm:$0xf]
        %v522 = vld [vmem:[%s409 + $0x1c0] sm:$0xf]
        %v523 = vld [vmem:[%s409 + $0x1c4] sm:$0xf]
        %v524 = vld [vmem:[%s409 + $0x1c8] sm:$0xf]
        %v525 = vld [vmem:[%s409 + $0x1cc] sm:$0xf]
        %v526 = vld [vmem:[%s409 + $0x1d0] sm:$0xf]
        %v527 = vld [vmem:[%s409 + $0x1d4] sm:$0xf]
        %v528 = vld [vmem:[%s409 + $0x1d8] sm:$0xf]
        %v529 = vld [vmem:[%s409 + $0x1dc] sm:$0xf]
        %v530 = vld [vmem:[%s409 + $0x1e0] sm:$0xf]
        %v531 = vld [vmem:[%s409 + $0x1e4] sm:$0xf]
        %v532 = vld [vmem:[%s409 + $0x1e8] sm:$0xf]
        %v533 = vld [vmem:[%s409 + $0x1ec] sm:$0xf]
        %v534 = vld [vmem:[%s409 + $0x1f0] sm:$0xf]
        %v535 = vld [vmem:[%s409 + $0x1f4] sm:$0xf]
        %v536 = vld [vmem:[%s409 + $0x1f8] sm:$0xf]
        %v537 = vld [vmem:[%s409 + $0x1fc] sm:$0xf]
        %v538 = vld [vmem:[%s409 + $0x200] sm:$0xf]
        %v539 = vld [vmem:[%s409 + $0x204] sm:$0xf]
        %v540 = vld [vmem:[%s409 + $0x208] sm:$0xf]
        %v541 = vld [vmem:[%s409 + $0x20c] sm:$0xf]
        %v542 = vld [vmem:[%s409 + $0x210] sm:$0xf]
        %v543 = vld [vmem:[%s409 + $0x214] sm:$0xf]
        %v544 = vld [vmem:[%s409 + $0x218] sm:$0xf]
        %v545 = vld [vmem:[%s409 + $0x21c] sm:$0xf]
        %v546 = vld [vmem:[%s409 + $0x220] sm:$0xf]
        %v547 = vld [vmem:[%s409 + $0x224] sm:$0xf]
        %v548 = vld [vmem:[%s409 + $0x228] sm:$0xf]
        %v549 = vld [vmem:[%s409 + $0x22c] sm:$0xf]
        %v550 = vld [vmem:[%s409 + $0x230] sm:$0xf]
        %v551 = vld [vmem:[%s409 + $0x234] sm:$0xf]
        %v552 = vld [vmem:[%s409 + $0x238] sm:$0xf]
        %v553 = vld [vmem:[%s409 + $0x23c] sm:$0xf]
        %v554 = vld [vmem:[#allocation2] sm:$0xff]
        %v555 = vld [vmem:[#allocation2 + $0x8] sm:$0xff]
        %v556 = vld [vmem:[#allocation2 + $0x10] sm:$0xff]
        %v557 = vld [vmem:[#allocation2 + $0x18] sm:$0xff]
        %v558 = vld [vmem:[#allocation2 + $0x20] sm:$0xff]
        %v559 = vld [vmem:[#allocation2 + $0x28] sm:$0xff]
        %v560 = vld [vmem:[#allocation2 + $0x30] sm:$0xff]
        %v561 = vld [vmem:[#allocation2 + $0x38] sm:$0xff]
        %v562 = vld [vmem:[#allocation2 + $0x40] sm:$0xff]
        %v564 = vlaneseq
        %v565 = vshrl.u32 %v564, 7
        %v566 = vsub.s32 0, %v565
        %v567 = vrot.slane %v387, %v566
        %v713 = vunpack.c.l.b16 %v410
        %v714 = vunpack.c.l.b16 %v411
        %v715 = vunpack.c.l.b16 %v412
        %v716 = vunpack.c.l.b16 %v413
        %v717 = vunpack.c.l.b16 %v414
        %v718 = vunpack.c.l.b16 %v415
        %v719 = vunpack.c.l.b16 %v416
        %v720 = vunpack.c.l.b16 %v417
        %v721 = vunpack.c.l.b16 %v418
        %v722 = vunpack.c.l.b16 %v419
        %v723 = vunpack.c.l.b16 %v420
        %v724 = vunpack.c.l.b16 %v421
        %v725 = vunpack.c.l.b16 %v422
        %v726 = vunpack.c.l.b16 %v423
        %v727 = vunpack.c.l.b16 %v424
        %v728 = vunpack.c.l.b16 %v425
        %v729 = vunpack.c.l.b16 %v426
        %v730 = vunpack.c.l.b16 %v427
        %v731 = vunpack.c.l.b16 %v428
        %v732 = vunpack.c.l.b16 %v429
        %v733 = vunpack.c.l.b16 %v430
        %v734 = vunpack.c.l.b16 %v431
        %v735 = vunpack.c.l.b16 %v432
        %v736 = vunpack.c.l.b16 %v433
        %v737 = vunpack.c.l.b16 %v434
        %v738 = vunpack.c.l.b16 %v435
        %v739 = vunpack.c.l.b16 %v436
        %v740 = vunpack.c.l.b16 %v437
        %v741 = vunpack.c.l.b16 %v438
        %v742 = vunpack.c.l.b16 %v439
        %v743 = vunpack.c.l.b16 %v440
        %v744 = vunpack.c.l.b16 %v441
        %v745 = vunpack.c.l.b16 %v442
        %v746 = vunpack.c.l.b16 %v443
        %v747 = vunpack.c.l.b16 %v444
        %v748 = vunpack.c.l.b16 %v445
        %v749 = vunpack.c.l.b16 %v446
        %v750 = vunpack.c.l.b16 %v447
        %v751 = vunpack.c.l.b16 %v448
        %v752 = vunpack.c.l.b16 %v449
        %v753 = vunpack.c.l.b16 %v450
        %v754 = vunpack.c.l.b16 %v451
        %v755 = vunpack.c.l.b16 %v452
        %v756 = vunpack.c.l.b16 %v453
        %v757 = vunpack.c.l.b16 %v454
        %v758 = vunpack.c.l.b16 %v455
        %v759 = vunpack.c.l.b16 %v456
        %v760 = vunpack.c.l.b16 %v457
        %v761 = vunpack.c.l.b16 %v458
        %v762 = vunpack.c.l.b16 %v459
        %v763 = vunpack.c.l.b16 %v460
        %v764 = vunpack.c.l.b16 %v461
        %v765 = vunpack.c.l.b16 %v462
        %v766 = vunpack.c.l.b16 %v463
        %v767 = vunpack.c.l.b16 %v464
        %v768 = vunpack.c.l.b16 %v465
        %v769 = vunpack.c.l.b16 %v466
        %v770 = vunpack.c.l.b16 %v467
        %v771 = vunpack.c.l.b16 %v468
        %v772 = vunpack.c.l.b16 %v469
        %v773 = vunpack.c.l.b16 %v470
        %v774 = vunpack.c.l.b16 %v471
        %v775 = vunpack.c.l.b16 %v472
        %v776 = vunpack.c.l.b16 %v473
        %v777 = vunpack.c.l.b16 %v474
        %v778 = vunpack.c.l.b16 %v475
        %v779 = vunpack.c.l.b16 %v476
        %v780 = vunpack.c.l.b16 %v477
        %v781 = vunpack.c.l.b16 %v478
        %v782 = vunpack.c.l.b16 %v479
        %v783 = vunpack.c.l.b16 %v480
        %v784 = vunpack.c.l.b16 %v481
        %v785 = vunpack.c.l.b16 %v482
        %v786 = vunpack.c.l.b16 %v483
        %v787 = vunpack.c.l.b16 %v484
        %v788 = vunpack.c.l.b16 %v485
        %v789 = vunpack.c.l.b16 %v486
        %v790 = vunpack.c.l.b16 %v487
        %v791 = vunpack.c.l.b16 %v488
        %v792 = vunpack.c.l.b16 %v489
        %v793 = vunpack.c.l.b16 %v490
        %v794 = vunpack.c.l.b16 %v491
        %v795 = vunpack.c.l.b16 %v492
        %v796 = vunpack.c.l.b16 %v493
        %v797 = vunpack.c.l.b16 %v494
        %v798 = vunpack.c.l.b16 %v495
        %v799 = vunpack.c.l.b16 %v496
        %v800 = vunpack.c.l.b16 %v497
        %v801 = vunpack.c.l.b16 %v498
        %v802 = vunpack.c.l.b16 %v499
        %v803 = vunpack.c.l.b16 %v500
        %v804 = vunpack.c.l.b16 %v501
        %v805 = vunpack.c.l.b16 %v502
        %v806 = vunpack.c.l.b16 %v503
        %v807 = vunpack.c.l.b16 %v504
        %v808 = vunpack.c.l.b16 %v505
        %v809 = vunpack.c.l.b16 %v506
        %v810 = vunpack.c.l.b16 %v507
        %v811 = vunpack.c.l.b16 %v508
        %v812 = vunpack.c.l.b16 %v509
        %v813 = vunpack.c.l.b16 %v510
        %v814 = vunpack.c.l.b16 %v511
        %v815 = vunpack.c.l.b16 %v512
        %v816 = vunpack.c.l.b16 %v513
        %v817 = vunpack.c.l.b16 %v514
        %v818 = vunpack.c.l.b16 %v515
        %v819 = vunpack.c.l.b16 %v516
        %v820 = vunpack.c.l.b16 %v517
        %v821 = vunpack.c.l.b16 %v518
        %v822 = vunpack.c.l.b16 %v519
        %v823 = vunpack.c.l.b16 %v520
        %v824 = vunpack.c.l.b16 %v521
        %v825 = vunpack.c.l.b16 %v522
        %v826 = vunpack.c.l.b16 %v523
        %v827 = vunpack.c.l.b16 %v524
        %v828 = vunpack.c.l.b16 %v525
        %v829 = vunpack.c.l.b16 %v526
        %v830 = vunpack.c.l.b16 %v527
        %v831 = vunpack.c.l.b16 %v528
        %v832 = vunpack.c.l.b16 %v529
        %v833 = vunpack.c.l.b16 %v530
        %v834 = vunpack.c.l.b16 %v531
        %v835 = vunpack.c.l.b16 %v532
        %v836 = vunpack.c.l.b16 %v533
        %v837 = vunpack.c.l.b16 %v534
        %v838 = vunpack.c.l.b16 %v535
        %v839 = vunpack.c.l.b16 %v536
        %v840 = vunpack.c.l.b16 %v537
        %v841 = vunpack.c.l.b16 %v538
        %v842 = vunpack.c.l.b16 %v539
        %v843 = vunpack.c.l.b16 %v540
        %v844 = vunpack.c.l.b16 %v541
        %v845 = vunpack.c.l.b16 %v542
        %v846 = vunpack.c.l.b16 %v543
        %v847 = vunpack.c.l.b16 %v544
        %v848 = vunpack.c.l.b16 %v545
        %v849 = vunpack.c.l.b16 %v546
        %v850 = vunpack.c.l.b16 %v547
        %v851 = vunpack.c.l.b16 %v548
        %v852 = vunpack.c.l.b16 %v549
        %v853 = vunpack.c.l.b16 %v550
        %v854 = vunpack.c.l.b16 %v551
        %v855 = vunpack.c.l.b16 %v552
        %v856 = vunpack.c.l.b16 %v553
        %v857 = vpack.c.b16 %v714, %v713
        %v858 = vpack.c.b16 %v716, %v715
        %v859 = vpack.c.b16 %v718, %v717
        %v860 = vpack.c.b16 %v720, %v719
        %v861 = vpack.c.b16 %v722, %v721
        %v862 = vpack.c.b16 %v724, %v723
        %v863 = vpack.c.b16 %v726, %v725
        %v864 = vpack.c.b16 %v728, %v727
        %v865 = vpack.c.b16 %v730, %v729
        %v866 = vpack.c.b16 %v732, %v731
        %v867 = vpack.c.b16 %v734, %v733
        %v868 = vpack.c.b16 %v736, %v735
        %v869 = vpack.c.b16 %v738, %v737
        %v870 = vpack.c.b16 %v740, %v739
        %v871 = vpack.c.b16 %v742, %v741
        %v872 = vpack.c.b16 %v744, %v743
        %v873 = vpack.c.b16 %v746, %v745
        %v874 = vpack.c.b16 %v748, %v747
        %v875 = vpack.c.b16 %v750, %v749
        %v876 = vpack.c.b16 %v752, %v751
        %v877 = vpack.c.b16 %v754, %v753
        %v878 = vpack.c.b16 %v756, %v755
        %v879 = vpack.c.b16 %v758, %v757
        %v880 = vpack.c.b16 %v760, %v759
        %v881 = vpack.c.b16 %v762, %v761
        %v882 = vpack.c.b16 %v764, %v763
        %v883 = vpack.c.b16 %v766, %v765
        %v884 = vpack.c.b16 %v768, %v767
        %v885 = vpack.c.b16 %v770, %v769
        %v886 = vpack.c.b16 %v772, %v771
        %v887 = vpack.c.b16 %v774, %v773
        %v888 = vpack.c.b16 %v776, %v775
        %v889 = vpack.c.b16 %v778, %v777
        %v890 = vpack.c.b16 %v780, %v779
        %v891 = vpack.c.b16 %v782, %v781
        %v892 = vpack.c.b16 %v784, %v783
        %v893 = vpack.c.b16 %v786, %v785
        %v894 = vpack.c.b16 %v788, %v787
        %v895 = vpack.c.b16 %v790, %v789
        %v896 = vpack.c.b16 %v792, %v791
        %v897 = vpack.c.b16 %v794, %v793
        %v898 = vpack.c.b16 %v796, %v795
        %v899 = vpack.c.b16 %v798, %v797
        %v900 = vpack.c.b16 %v800, %v799
        %v901 = vpack.c.b16 %v802, %v801
        %v902 = vpack.c.b16 %v804, %v803
        %v903 = vpack.c.b16 %v806, %v805
        %v904 = vpack.c.b16 %v808, %v807
        %v905 = vpack.c.b16 %v810, %v809
        %v906 = vpack.c.b16 %v812, %v811
        %v907 = vpack.c.b16 %v814, %v813
        %v908 = vpack.c.b16 %v816, %v815
        %v909 = vpack.c.b16 %v818, %v817
        %v910 = vpack.c.b16 %v820, %v819
        %v911 = vpack.c.b16 %v822, %v821
        %v912 = vpack.c.b16 %v824, %v823
        %v913 = vpack.c.b16 %v826, %v825
        %v914 = vpack.c.b16 %v828, %v827
        %v915 = vpack.c.b16 %v830, %v829
        %v916 = vpack.c.b16 %v832, %v831
        %v917 = vpack.c.b16 %v834, %v833
        %v918 = vpack.c.b16 %v836, %v835
        %v919 = vpack.c.b16 %v838, %v837
        %v920 = vpack.c.b16 %v840, %v839
        %v921 = vpack.c.b16 %v842, %v841
        %v922 = vpack.c.b16 %v844, %v843
        %v923 = vpack.c.b16 %v846, %v845
        %v924 = vpack.c.b16 %v848, %v847
        %v925 = vpack.c.b16 %v850, %v849
        %v926 = vpack.c.b16 %v852, %v851
        %v927 = vpack.c.b16 %v854, %v853
        %v928 = vpack.c.b16 %v856, %v855
        %1001 = vmatprep.subr.bf16.mxu0 0
        %1002 = vmatpush1.bf16.msra.mxu0 %v857
        %1003 = vmatprep.subr.bf16.mxu0 0
        %1004 = vmatpush1.bf16.msra.mxu0 %v858
        %1005 = vmatprep.subr.bf16.mxu0 0
        %1006 = vmatpush1.bf16.msra.mxu0 %v859
        %1007 = vmatprep.subr.bf16.mxu0 0
        %1008 = vmatpush1.bf16.msra.mxu0 %v860
        %1009 = vmatprep.subr.bf16.mxu0 0
        %1010 = vmatpush1.bf16.msra.mxu0 %v861
        %1011 = vmatprep.subr.bf16.mxu0 0
        %1012 = vmatpush1.bf16.msra.mxu0 %v862
        %1013 = vmatprep.subr.bf16.mxu0 0
        %1014 = vmatpush1.bf16.msra.mxu0 %v863
        %1015 = vmatprep.subr.bf16.mxu0 0
        %1016 = vmatpush1.bf16.msra.mxu0 %v864
        %1017 = vmatprep.subr.bf16.mxu0 0
        %1018 = vmatpush1.bf16.msra.mxu0 %v865
        %1019 = vmatprep.subr.bf16.mxu0 0
        %1020 = vmatpush1.bf16.msra.mxu0 %v866
        %1021 = vmatprep.subr.bf16.mxu0 0
        %1022 = vmatpush1.bf16.msra.mxu0 %v867
        %1023 = vmatprep.subr.bf16.mxu0 0
        %1024 = vmatpush1.bf16.msra.mxu0 %v868
        %1025 = vmatprep.subr.bf16.mxu0 0
        %1026 = vmatpush1.bf16.msra.mxu0 %v869
        %1027 = vmatprep.subr.bf16.mxu0 0
        %1028 = vmatpush1.bf16.msra.mxu0 %v870
        %1029 = vmatprep.subr.bf16.mxu0 0
        %1030 = vmatpush1.bf16.msra.mxu0 %v871
        %1031 = vmatprep.subr.bf16.mxu0 0
        %1032 = vmatpush1.bf16.msra.mxu0 %v872
        %1033 = vmatprep.mubr.bf16.mxu0 %v555
        %1034 = vmatmul.mubr.bf16.gmra.mrb[0].mxu0 %v554
        %v1035 = vpop.f32.mrb[0].mxu0
        %v1036 = vadd.f32 %v567, %v1035
        %v1037 = vpop.f32.mrb[0].mxu0
        %v1038 = vpop.f32.mrb[0].mxu0
        %v1039 = vadd.f32 %v567, %v1038
        %v1040 = vpop.f32.mrb[0].mxu0
        %1041 = vdwg.mxu0
        %1042 = vmatprep.subr.bf16.mxu0 0
        %1043 = vmatpush1.bf16.msra.mxu0 %v873
        %1044 = vmatprep.subr.bf16.mxu0 0
        %1045 = vmatpush1.bf16.msra.mxu0 %v874
        %1046 = vmatprep.subr.bf16.mxu0 0
        %1047 = vmatpush1.bf16.msra.mxu0 %v875
        %1048 = vmatprep.subr.bf16.mxu0 0
        %1049 = vmatpush1.bf16.msra.mxu0 %v876
        %1050 = vmatprep.subr.bf16.mxu0 0
        %1051 = vmatpush1.bf16.msra.mxu0 %v877
        %1052 = vmatprep.subr.bf16.mxu0 0
        %1053 = vmatpush1.bf16.msra.mxu0 %v878
        %1054 = vmatprep.subr.bf16.mxu0 0
        %1055 = vmatpush1.bf16.msra.mxu0 %v879
        %1056 = vmatprep.subr.bf16.mxu0 0
        %1057 = vmatpush1.bf16.msra.mxu0 %v880
        %1058 = vmatprep.subr.bf16.mxu0 0
        %1059 = vmatpush1.bf16.msra.mxu0 %v881
        %1060 = vmatprep.subr.bf16.mxu0 0
        %1061 = vmatpush1.bf16.msra.mxu0 %v882
        %1062 = vmatprep.subr.bf16.mxu0 0
        %1063 = vmatpush1.bf16.msra.mxu0 %v883
        %1064 = vmatprep.subr.bf16.mxu0 0
        %1065 = vmatpush1.bf16.msra.mxu0 %v884
        %1066 = vmatprep.subr.bf16.mxu0 0
        %1067 = vmatpush1.bf16.msra.mxu0 %v885
        %1068 = vmatprep.subr.bf16.mxu0 0
        %1069 = vmatpush1.bf16.msra.mxu0 %v886
        %1070 = vmatprep.subr.bf16.mxu0 0
        %1071 = vmatpush1.bf16.msra.mxu0 %v887
        %1072 = vmatprep.subr.bf16.mxu0 0
        %1073 = vmatpush1.bf16.msra.mxu0 %v888
        %1074 = vmatprep.mubr.bf16.mxu0 %v557
        %1075 = vmatmul.mubr.bf16.gmra.mrb[0].mxu0 %v556
        %v1076 = vpop.f32.mrb[0].mxu0
        %v1077 = vadd.f32 %v1036, %v1076
        %v1078 = vpop.f32.mrb[0].mxu0
        %v1079 = vpop.f32.mrb[0].mxu0
        %v1080 = vadd.f32 %v1039, %v1079
        %v1081 = vpop.f32.mrb[0].mxu0
        %1082 = vdwg.mxu0
        %1083 = vmatprep.subr.bf16.mxu0 0
        %1084 = vmatpush1.bf16.msra.mxu0 %v889
        %1085 = vmatprep.subr.bf16.mxu0 0
        %1086 = vmatpush1.bf16.msra.mxu0 %v890
        %1087 = vmatprep.subr.bf16.mxu0 0
        %1088 = vmatpush1.bf16.msra.mxu0 %v891
        %1089 = vmatprep.subr.bf16.mxu0 0
        %1090 = vmatpush1.bf16.msra.mxu0 %v892
        %1091 = vmatprep.subr.bf16.mxu0 0
        %1092 = vmatpush1.bf16.msra.mxu0 %v893
        %1093 = vmatprep.subr.bf16.mxu0 0
        %1094 = vmatpush1.bf16.msra.mxu0 %v894
        %1095 = vmatprep.subr.bf16.mxu0 0
        %1096 = vmatpush1.bf16.msra.mxu0 %v895
        %1097 = vmatprep.subr.bf16.mxu0 0
        %1098 = vmatpush1.bf16.msra.mxu0 %v896
        %1099 = vmatprep.subr.bf16.mxu0 0
        %1100 = vmatpush1.bf16.msra.mxu0 %v897
        %1101 = vmatprep.subr.bf16.mxu0 0
        %1102 = vmatpush1.bf16.msra.mxu0 %v898
        %1103 = vmatprep.subr.bf16.mxu0 0
        %1104 = vmatpush1.bf16.msra.mxu0 %v899
        %1105 = vmatprep.subr.bf16.mxu0 0
        %1106 = vmatpush1.bf16.msra.mxu0 %v900
        %1107 = vmatprep.subr.bf16.mxu0 0
        %1108 = vmatpush1.bf16.msra.mxu0 %v901
        %1109 = vmatprep.subr.bf16.mxu0 0
        %1110 = vmatpush1.bf16.msra.mxu0 %v902
        %1111 = vmatprep.subr.bf16.mxu0 0
        %1112 = vmatpush1.bf16.msra.mxu0 %v903
        %1113 = vmatprep.subr.bf16.mxu0 0
        %1114 = vmatpush1.bf16.msra.mxu0 %v904
        %1115 = vmatprep.mubr.bf16.mxu0 %v559
        %1116 = vmatmul.mubr.bf16.gmra.mrb[0].mxu0 %v558
        %v1117 = vpop.f32.mrb[0].mxu0
        %v1118 = vadd.f32 %v1077, %v1117
        %v1119 = vpop.f32.mrb[0].mxu0
        %v1120 = vpop.f32.mrb[0].mxu0
        %v1121 = vadd.f32 %v1080, %v1120
        %v1122 = vpop.f32.mrb[0].mxu0
        %1123 = vdwg.mxu0
        %1124 = vmatprep.subr.bf16.mxu0 0
        %1125 = vmatpush1.bf16.msra.mxu0 %v905
        %1126 = vmatprep.subr.bf16.mxu0 0
        %1127 = vmatpush1.bf16.msra.mxu0 %v906
        %1128 = vmatprep.subr.bf16.mxu0 0
        %1129 = vmatpush1.bf16.msra.mxu0 %v907
        %1130 = vmatprep.subr.bf16.mxu0 0
        %1131 = vmatpush1.bf16.msra.mxu0 %v908
        %1132 = vmatprep.subr.bf16.mxu0 0
        %1133 = vmatpush1.bf16.msra.mxu0 %v909
        %1134 = vmatprep.subr.bf16.mxu0 0
        %1135 = vmatpush1.bf16.msra.mxu0 %v910
        %1136 = vmatprep.subr.bf16.mxu0 0
        %1137 = vmatpush1.bf16.msra.mxu0 %v911
        %1138 = vmatprep.subr.bf16.mxu0 0
        %1139 = vmatpush1.bf16.msra.mxu0 %v912
        %1140 = vmatprep.subr.bf16.mxu0 0
        %1141 = vmatpush1.bf16.msra.mxu0 %v913
        %1142 = vmatprep.subr.bf16.mxu0 0
        %1143 = vmatpush1.bf16.msra.mxu0 %v914
        %1144 = vmatprep.subr.bf16.mxu0 0
        %1145 = vmatpush1.bf16.msra.mxu0 %v915
        %1146 = vmatprep.subr.bf16.mxu0 0
        %1147 = vmatpush1.bf16.msra.mxu0 %v916
        %1148 = vmatprep.subr.bf16.mxu0 0
        %1149 = vmatpush1.bf16.msra.mxu0 %v917
        %1150 = vmatprep.subr.bf16.mxu0 0
        %1151 = vmatpush1.bf16.msra.mxu0 %v918
        %1152 = vmatprep.subr.bf16.mxu0 0
        %1153 = vmatpush1.bf16.msra.mxu0 %v919
        %1154 = vmatprep.subr.bf16.mxu0 0
        %1155 = vmatpush1.bf16.msra.mxu0 %v920
        %1156 = vmatprep.mubr.bf16.mxu0 %v561
        %1157 = vmatmul.mubr.bf16.gmra.mrb[0].mxu0 %v560
        %v1158 = vpop.f32.mrb[0].mxu0
        %v1159 = vadd.f32 %v1118, %v1158
        %v1160 = vpop.f32.mrb[0].mxu0
        %v1161 = vpop.f32.mrb[0].mxu0
        %v1162 = vadd.f32 %v1121, %v1161
        %v1163 = vpop.f32.mrb[0].mxu0
        %1164 = vdwg.mxu0
        %1165 = vmatprep.subr.bf16.mxu0 0
        %1166 = vmatpush1.bf16.msra.mxu0 %v921
        %1167 = vmatprep.subr.bf16.mxu0 0
        %1168 = vmatpush1.bf16.msra.mxu0 %v922
        %1169 = vmatprep.subr.bf16.mxu0 0
        %1170 = vmatpush1.bf16.msra.mxu0 %v923
        %1171 = vmatprep.subr.bf16.mxu0 0
        %1172 = vmatpush1.bf16.msra.mxu0 %v924
        %1173 = vmatprep.subr.bf16.mxu0 0
        %1174 = vmatpush1.bf16.msra.mxu0 %v925
        %1175 = vmatprep.subr.bf16.mxu0 0
        %1176 = vmatpush1.bf16.msra.mxu0 %v926
        %1177 = vmatprep.subr.bf16.mxu0 0
        %1178 = vmatpush1.bf16.msra.mxu0 %v927
        %1179 = vmatprep.subr.bf16.mxu0 0
        %1180 = vmatpush1.bf16.msra.mxu0 %v928
        %1181 = vmatprep.subr.bf16.mxu0 0
        %1182 = vmatpush1.bf16.msra.mxu0 0
        %1183 = vmatprep.subr.bf16.mxu0 0
        %1184 = vmatpush1.bf16.msra.mxu0 0
        %1185 = vmatprep.subr.bf16.mxu0 0
        %1186 = vmatpush1.bf16.msra.mxu0 0
        %1187 = vmatprep.subr.bf16.mxu0 0
        %1188 = vmatpush1.bf16.msra.mxu0 0
        %1189 = vmatprep.subr.bf16.mxu0 0
        %1190 = vmatpush1.bf16.msra.mxu0 0
        %1191 = vmatprep.subr.bf16.mxu0 0
        %1192 = vmatpush1.bf16.msra.mxu0 0
        %1193 = vmatprep.subr.bf16.mxu0 0
        %1194 = vmatpush1.bf16.msra.mxu0 0
        %1195 = vmatprep.subr.bf16.mxu0 0
        %1196 = vmatpush1.bf16.msra.mxu0 0
        %1197 = vmatprep.mubr.bf16.mxu0 0
        %1198 = vmatmul.mubr.bf16.gmra.mrb[0].mxu0 %v562
        %v1199 = vpop.f32.mrb[0].mxu0
        %v1200 = vadd.f32 %v1159, %v1199
        %v1201 = vpop.f32.mrb[0].mxu0
        %v1202 = vpop.f32.mrb[0].mxu0
        %v1203 = vadd.f32 %v1162, %v1202
        %v1204 = vpop.f32.mrb[0].mxu0
        %1205 = vdwg.mxu0
        %v1206 = vmax.f32 %v1200, 0.0
        %v1207 = vmax.f32 %v1203, 0.0
        %v1208 = vpack.c.bf16 %v1207, %v1206
        %v1209 = vld [vmem:[#allocation3] sm:$0xff]
        %v1210 = vld [vmem:[#allocation3 + $0x8] sm:$0xff]
        %v1227 = vunpack.c.l.b16 %v391
        %v1228 = vunpack.c.l.b16 %v392
        %v1229 = vunpack.c.l.b16 %v393
        %v1230 = vunpack.c.l.b16 %v394
        %v1231 = vunpack.c.l.b16 %v395
        %v1232 = vunpack.c.l.b16 %v396
        %v1233 = vunpack.c.l.b16 %v397
        %v1234 = vunpack.c.l.b16 %v398
        %v1235 = vunpack.c.l.b16 %v399
        %v1236 = vunpack.c.l.b16 %v400
        %v1237 = vunpack.c.l.b16 %v401
        %v1238 = vunpack.c.l.b16 %v402
        %v1239 = vunpack.c.l.b16 %v403
        %v1240 = vunpack.c.l.b16 %v404
        %v1241 = vunpack.c.l.b16 %v405
        %v1242 = vunpack.c.l.b16 %v406
        %v1243 = vpack.c.b16 %v1228, %v1227
        %v1244 = vpack.c.b16 %v1230, %v1229
        %v1245 = vpack.c.b16 %v1232, %v1231
        %v1246 = vpack.c.b16 %v1234, %v1233
        %v1247 = vpack.c.b16 %v1236, %v1235
        %v1248 = vpack.c.b16 %v1238, %v1237
        %v1249 = vpack.c.b16 %v1240, %v1239
        %v1250 = vpack.c.b16 %v1242, %v1241
        %1259 = vmatprep.subr.bf16.mxu0 0
        %1260 = vmatpush1.bf16.msra.mxu0 %v1243
        %1261 = vmatprep.subr.bf16.mxu0 0
        %1262 = vmatpush1.bf16.msra.mxu0 %v1244
        %1263 = vmatprep.subr.bf16.mxu0 0
        %1264 = vmatpush1.bf16.msra.mxu0 %v1245
        %1265 = vmatprep.subr.bf16.mxu0 0
        %1266 = vmatpush1.bf16.msra.mxu0 %v1246
        %1267 = vmatprep.subr.bf16.mxu0 0
        %1268 = vmatpush1.bf16.msra.mxu0 %v1247
        %1269 = vmatprep.subr.bf16.mxu0 0
        %1270 = vmatpush1.bf16.msra.mxu0 %v1248
        %1271 = vmatprep.subr.bf16.mxu0 0
        %1272 = vmatpush1.bf16.msra.mxu0 %v1249
        %1273 = vmatprep.subr.bf16.mxu0 0
        %1274 = vmatpush1.bf16.msra.mxu0 %v1250
        %1275 = vmatprep.subr.bf16.mxu0 0
        %1276 = vmatpush1.bf16.msra.mxu0 0
        %1277 = vmatprep.subr.bf16.mxu0 0
        %1278 = vmatpush1.bf16.msra.mxu0 0
        %1279 = vmatprep.subr.bf16.mxu0 0
        %1280 = vmatpush1.bf16.msra.mxu0 0
        %1281 = vmatprep.subr.bf16.mxu0 0
        %1282 = vmatpush1.bf16.msra.mxu0 0
        %1283 = vmatprep.subr.bf16.mxu0 0
        %1284 = vmatpush1.bf16.msra.mxu0 0
        %1285 = vmatprep.subr.bf16.mxu0 0
        %1286 = vmatpush1.bf16.msra.mxu0 0
        %1287 = vmatprep.subr.bf16.mxu0 0
        %1288 = vmatpush1.bf16.msra.mxu0 0
        %1289 = vmatprep.subr.bf16.mxu0 0
        %1290 = vmatpush1.bf16.msra.mxu0 0
        %1291 = vmatprep.mubr.bf16.mxu0 0
        %1292 = vmatmul.mubr.bf16.gmra.mrb[0].mxu0 %v1208
        %v1293 = vpop.f32.mrb[0].mxu0
        %v1294 = vadd.f32 0.0, %v1293
        %v1295 = vpop.f32.mrb[0].mxu0
        %v1296 = vpop.f32.mrb[0].mxu0
        %v1297 = vadd.f32 0.0, %v1296
        %v1298 = vpop.f32.mrb[0].mxu0
        %1299 = vdwg.mxu0
        %v1300 = vadd.f32 %v1209, %v1294
        %v1301 = vadd.f32 %v1210, %v1297
        %1302 = vst [vmem:[#allocation3] sm:$0xff] %v1300
        %1303 = vst [vmem:[#allocation3 + $0x8] sm:$0xff] %v1301
        // Predicated region
        $region57: #{tpu_custom_call.1} parent=39 // pred_check
          %p1304 = pneg %p299
        $region58: #{tpu_custom_call.1} parent=39 // pred_check_branch
          %1306 = sbr.rel (%p1304) target = $region60
        $region59: #{tpu_custom_call.1} parent=39 // pred_region
          %v1307 = vld [vmem:[#allocation3] sm:$0xff]
          %v1308 = vld [vmem:[#allocation3 + $0x8] sm:$0xff]
          %v1309 = vld [vmem:[%s4] sm:$0x1]
          %v1311 = vlaneseq
          %v1312 = vshrl.u32 %v1311, 7
          %v1313 = vsub.s32 0, %v1312
          %v1314 = vrot.slane %v1309, %v1313
          %v1316 = vadd.f32 %v1307, %v1314
          %v1317 = vadd.f32 %v1308, %v1314
          %1318 = vst [vmem:[%s296] sm:$0xff] %v1316
          %1319 = vst [vmem:[%s296 + $0x8] sm:$0xff] %v1317
        $region60: #{tpu_custom_call.1} parent=39 // pred_fallthru
          _
        %s1320 = sand.u32 %s164, 1
        %s1321 = scalar_lea.sflag [#allocation6], %s1320
        %s1322 = sand.u32 %s164, 1
        %s1323 = smul.addr %s1322, 16
        %s1324 = scalar_lea.vmem [#allocation10], %s1323
        // Predicated region
        $region61: #{tpu_custom_call.1} parent=39 // pred_check
          %p1325 = pneg %p174
        $region62: #{tpu_custom_call.1} parent=39 // pred_check_branch
          %1327 = sbr.rel (%p1325) target = $region64
        $region63: #{tpu_custom_call.1} parent=39 // pred_region
          %s1328 = smul.u32 2, %s29
          %s1330 = ssub.s32 256, 256
          %1331 = vsyncadd %s1321, %s1330
          %s1332 = smul.addr %s28, 2
          %s1333 = sadd.s32 %s1328, %s1332
          %s1334 = smul.addr %s1333, 128
          %s1335 = scalar_lea.hbm %s5, %s1334
          %s1336 = sshll.u32 %s1324, 4
          %s1337 = int_to_ptr.vmem [resolvable:$true] %s1336
          %1342 = dma.vmem_to_hbm [thread:$0]  %s1337, 256, %s1335, %s1321, 128, 128, 8
        $region64: #{tpu_custom_call.1} parent=39 // pred_fallthru
          _
      $region40: #{tpu_custom_call.1} parent=5 // pred_fallthru
        _
      %p1343 = scmp.le.s32.totalorder 2, %s18
      // Predicated region
      $region65: #{tpu_custom_call.1} parent=5 // pred_check
        %p1344 = pneg %p1343
      $region66: #{tpu_custom_call.1} parent=5 // pred_check_branch
        %1346 = sbr.rel (%p1344) target = $region68
      $region67: #{tpu_custom_call.1} parent=5 // pred_region
        %s1347 = ssub.s32 %s18, 2
        // Predicated region
        $region69: #{tpu_custom_call.1} parent=67 // pred_check
          %p1348 = pneg %p180
        $region70: #{tpu_custom_call.1} parent=67 // pred_check_branch
          %1350 = sbr.rel (%p1348) target = $region72
        $region71: #{tpu_custom_call.1} parent=67 // pred_region
          %s1351 = sand.u32 %s165, 1
          %s1352 = scalar_lea.sflag [#allocation6], %s1351
          %s1353 = sand.u32 %s165, 1
          %s1354 = smul.addr %s1353, 16
          %s1355 = scalar_lea.vmem [#allocation10], %s1354
          %1356 = dma.done %s1352, 256
        $region72: #{tpu_custom_call.1} parent=67 // pred_fallthru
          _
      $region68: #{tpu_custom_call.1} parent=5 // pred_fallthru
        _
    $region6: #{tpu_custom_call.1} parent=1 // loop_footer
      %s22 = sadd.s32 1, %s18
    $region7: #{tpu_custom_call.1} parent=1 // loop_footer_branch
      %17 = sbr.rel target = $region3
    $region8: #{tpu_custom_call.1} parent=1 // loop_exit
      _
    %1357 = vsyncpa [#allocation5], 1
    %s1358 = scalar_lea.sflag [#allocation5], 1
    %1359 = vsyncpa %s1358, 1
    %1360 = vsyncpa [#allocation8], 1
    %1361 = vsyncpa [#allocation6], 1
    %s1362 = scalar_lea.sflag [#allocation6], 1
    %1363 = vsyncpa %s1362, 1

</llo_original>
